<compile_context>
chip_gen: v5e
topology: v5e:2x2
jax: 0.10.0
libtpu: 0.0.40
codegen_flags: <defaults>
</compile_context>

<pallas_src>
import functools

import jax
import jax.numpy as jnp
import numpy as np
from jax import lax
from jax.experimental import pallas as pl
from jax.experimental.pallas import tpu as pltpu


def _round_up(v, m):
    return ((v + m - 1) // m) * m


# ---------------------------------------------------------------------------
# Stage 1: LorentzLinear, tiled over node chunks, output transposed (Dp, Nc).
# w_ref: (Dp, d) = [zeros(1,d); W],  xtail_ref: (d, Nc) = x[:,1:].T chunk,
# b_ref: (Dp, 1) = [0; bias].
# ---------------------------------------------------------------------------
def _lorentz_linear_kernel(c, w_ref, xtail_ref, b_ref, out_ref):
    mx = jnp.dot(w_ref[...], xtail_ref[...],
                 preferred_element_type=jnp.float32,
                 precision=lax.Precision.HIGHEST) + b_ref[...]        # (Dp, Nc), row0 == 0
    head = jnp.sqrt(jnp.sum(mx * mx, axis=0, keepdims=True) + c)      # (1, Nc)
    row = lax.broadcasted_iota(jnp.int32, mx.shape, 0)
    out_ref[...] = jnp.where(row == 0, head, mx)                      # [head; mx.T] chunk


# ---------------------------------------------------------------------------
# Stage 2: per-edge attention, grid = (edge blocks, node chunks).
# xt_ref:  (Dp, Nc)     node chunk k of xt_T (streamed, pipelined),
# idx_ref: (1, 2*Eb)    int32 lane-dense [idx0 block i | idx1 block i],
# att_ref: (1, Eb)      f32 lane-dense output block i,
# acc_ref: (Dp, 2*Eb)   f32 VMEM accumulator (gathered endpoints).
# ---------------------------------------------------------------------------
def _edge_att_kernel(c, nc, xt_ref, idx_ref, att_ref, acc_ref):
    k = pl.program_id(1)

    @pl.when(k == 0)
    def _():
        acc_ref[...] = jnp.zeros_like(acc_ref)

    idx = idx_ref[...]                                                 # (1, 2*Eb)
    # Narrow iota: only Nc node ids generated, broadcast happens inside the compare.
    node_ids = k * nc + lax.broadcasted_iota(jnp.int32, (nc, 1), 0)    # (Nc, 1)
    oh = (node_ids == idx).astype(jnp.float32)                         # (Nc, 2*Eb) one-hot chunk
    # One MXU matmul gathers both endpoints of the block for this node chunk.
    acc_ref[...] += jnp.dot(xt_ref[...], oh,
                            preferred_element_type=jnp.float32,
                            precision=lax.Precision.HIGHEST)           # (Dp, 2*Eb)

    @pl.when(k == pl.num_programs(1) - 1)
    def _():
        g = acc_ref[...]
        eb = att_ref.shape[-1]
        gx = g[:, :eb]                                                 # (Dp, Eb) aligned slices
        gy = g[:, eb:]
        prod = gx * gy
        # Lorentz inner product: -head_i*head_j + tail_i.tail_j
        l_inner = jnp.sum(prod, axis=0, keepdims=True) - 2.0 * prod[0:1, :]   # (1, Eb)
        res = jnp.clip(-(c + l_inner), 1e-10, 1.0)
        att_ref[...] = jnp.exp(-res)


def lorentz_sparse_sq_dis_att(x, adj_indices, adj_size, weight, bias, c, *,
                              block_e=512, node_chunk=1024):
    """x: (N, in_features+1) f32; adj_indices: (2, E) int32; weight: (d, d); bias: (d,)."""
    n, dim = x.shape
    d = dim - 1
    dp = d + 1
    e = adj_indices.shape[1]
    c = float(c)

    if e == 0:  # empty adjacency
        return adj_indices, jnp.zeros((0,), jnp.float32), adj_size

    # ---- node-chunk / padding setup (multiples of 128 lanes) ----
    nc = min(_round_up(max(int(node_chunk), 128), 128), _round_up(n, 128))
    n_pad = _round_up(n, nc)
    nk = n_pad // nc

    # ---- wrapper-side layout plumbing (free) ----
    x_tail_t = x[:, 1:].astype(jnp.float32).T                          # (d, N)
    if n_pad > n:
        x_tail_t = jnp.pad(x_tail_t, ((0, 0), (0, n_pad - n)))         # zero padding nodes
    w_aug = jnp.concatenate([jnp.zeros((1, d), jnp.float32),
                             weight.astype(jnp.float32)], axis=0)      # (Dp, d)
    b_aug = jnp.concatenate([jnp.zeros((1,), jnp.float32),
                             bias.astype(jnp.float32)]).reshape(dp, 1)  # (Dp, 1)

    # ---- stage 1: LorentzLinear, tiled over node chunks ----
    xt_t = pl.pallas_call(
        functools.partial(_lorentz_linear_kernel, c),
        out_shape=jax.ShapeDtypeStruct((dp, n_pad), jnp.float32),
        grid=(nk,),
        in_specs=[
            pl.BlockSpec((dp, d), lambda i: (0, 0)),
            pl.BlockSpec((d, nc), lambda i: (0, i)),
            pl.BlockSpec((dp, 1), lambda i: (0, 0)),
        ],
        out_specs=pl.BlockSpec((dp, nc), lambda i: (0, i)),
        compiler_params=pltpu.CompilerParams(
            dimension_semantics=("parallel",)),
    )(w_aug, x_tail_t, b_aug)

    # ---- stage 2: edge-tiled attention with N-chunk reduction ----
    eb = min(_round_up(max(int(block_e), 128), 128), _round_up(e, 128))
    e_pad = _round_up(e, eb)
    nb = e_pad // eb

    idx = adj_indices.astype(jnp.int32)
    pad = e_pad - e
    idx0 = jnp.pad(idx[0], (0, pad)).reshape(nb, eb)
    idx1 = jnp.pad(idx[1], (0, pad)).reshape(nb, eb)
    # Per block: lanes [0, eb) = source indices, lanes [eb, 2*eb) = target indices.
    idx_cat = jnp.concatenate([idx0, idx1], axis=1).reshape(1, nb * 2 * eb)

    att_padded = pl.pallas_call(
        functools.partial(_edge_att_kernel, c, nc),
        out_shape=jax.ShapeDtypeStruct((1, e_pad), jnp.float32),
        grid=(nb, nk),                                        # reduction axis last
        in_specs=[
            pl.BlockSpec((dp, nc), lambda i, k: (0, k)),      # streamed node chunk
            pl.BlockSpec((1, 2 * eb), lambda i, k: (0, i)),   # per-edge-block indices
        ],
        out_specs=pl.BlockSpec((1, eb), lambda i, k: (0, i)),  # lane-dense output
        scratch_shapes=[pltpu.VMEM((dp, 2 * eb), jnp.float32)],
        compiler_params=pltpu.CompilerParams(
            dimension_semantics=("parallel", "arbitrary"),     # edge blocks shard on megacore
            vmem_limit_bytes=32 * 1024 * 1024),
    )(xt_t, idx_cat)

    att = att_padded[0, :e]
    return adj_indices, att, adj_size


def _reference(x, adj_indices, weight, bias, c):
    x_tail = x[:, 1:]
    mx = x_tail @ weight.T + bias
    head = jnp.sqrt(jnp.sum(mx * mx, axis=-1, keepdims=True) + c)
    xt = jnp.concatenate([head, mx], axis=1)
    gx = xt[adj_indices[0]]
    gy = xt[adj_indices[1]]
    l_inner = -(gx[:, 0] * gy[:, 0]) + jnp.sum(gx[:, 1:] * gy[:, 1:], axis=-1)
    res = jnp.clip(-(c + l_inner), 1e-10, 1.0)
    return jnp.exp(-res)


if __name__ == "__main__":
    c = 1.0
    key = jax.random.PRNGKey(0)
    k_tail, k_w, k_tail2, k_src, k_dst = jax.random.split(key, 5)

    # --- Test 1: small, module-consistent shapes: in_features=8 -> ambient dim 9, N=16. ---
    N = 16
    in_features = 8

    x_tail = jax.random.normal(k_tail, (N, in_features), dtype=jnp.float32)
    x_head = jnp.sqrt(jnp.sum(x_tail * x_tail, axis=-1, keepdims=True) + c)
    x = jnp.concatenate([x_head, x_tail], axis=1)            # (N, in_features + 1)

    # LorentzLinear params: weight (out_features-1, in_features) = (8, 8), xavier_uniform; bias = 0.
    bound = float(np.sqrt(6.0 / (in_features + in_features)))
    weight = jax.random.uniform(k_w, (in_features, in_features),
                                minval=-bound, maxval=bound, dtype=jnp.float32)
    bias = jnp.zeros((in_features,), dtype=jnp.float32)

    # Sparse adjacency: self-loops + directed ring -> E = 32 nonzeros.
    src = np.concatenate([np.arange(N), np.arange(N)])
    dst = np.concatenate([np.arange(N), (np.arange(N) + 1) % N])
    adj_indices = jnp.asarray(np.stack([src, dst]), dtype=jnp.int32)   # (2, E)
    adj_size = (N, N)

    index_out, att, size_out = lorentz_sparse_sq_dis_att(
        x, adj_indices, adj_size, weight, bias, c)
    att = jax.block_until_ready(att)

    ref = _reference(x, adj_indices, weight, bias, c)
    np.testing.assert_allclose(np.asarray(att), np.asarray(ref), rtol=1e-5, atol=1e-5)
    assert index_out.shape == (2, 2 * N) and att.shape == (2 * N,) and size_out == (N, N)

    # --- Test 2: exercise multi-edge-block + multi-node-chunk reduction path. ---
    N2, E2 = 200, 300
    x_tail2 = jax.random.normal(k_tail2, (N2, in_features), dtype=jnp.float32)
    x_head2 = jnp.sqrt(jnp.sum(x_tail2 * x_tail2, axis=-1, keepdims=True) + c)
    x2 = jnp.concatenate([x_head2, x_tail2], axis=1)
    src2 = jax.random.randint(k_src, (E2,), 0, N2, dtype=jnp.int32)
    dst2 = jax.random.randint(k_dst, (E2,), 0, N2, dtype=jnp.int32)
    adj2 = jnp.stack([src2, dst2])                                     # (2, E2)

    _, att2, _ = lorentz_sparse_sq_dis_att(
        x2, adj2, (N2, N2), weight, bias, c, block_e=128, node_chunk=128)
    att2 = jax.block_until_ready(att2)
    ref2 = _reference(x2, adj2, weight, bias, c)
    np.testing.assert_allclose(np.asarray(att2), np.asarray(ref2), rtol=1e-5, atol=1e-5)

    print("KERNEL_OK")
</pallas_src>

<mosaic_0001>
module attributes {stable_mosaic.version = 11 : i64} {
  func.func @_lorentz_linear_kernel(%arg0: i32, %arg1: memref<9x8xf32, #tpu.memory_space<vmem>>, %arg2: memref<8x128xf32, #tpu.memory_space<vmem>>, %arg3: memref<9x1xf32, #tpu.memory_space<vmem>>, %arg4: memref<9x128xf32, #tpu.memory_space<vmem>>) attributes {dimension_semantics = [#tpu.dimension_semantics<parallel>], iteration_bounds = array<i64: 1>, scalar_prefetch = 0 : i64, scratch_operands = 0 : i64, tpu.core_type = #tpu.core_type<tc>, window_params = [{pipeline_mode = #tpu.pipeline_mode<synchronous>, transform_indices = @transform_0, window_bounds = array<i64: 9, 8>}, {transform_indices = @transform_1, window_bounds = array<i64: 8, 128>}, {pipeline_mode = #tpu.pipeline_mode<synchronous>, transform_indices = @transform_2, window_bounds = array<i64: 9, 1>}, {transform_indices = @transform_3, window_bounds = array<i64: 9, 128>}]} {
    %c0 = arith.constant 0 : index
    %c0_0 = arith.constant 0 : index
    %0 = vector.load %arg1[%c0, %c0_0] : memref<9x8xf32, #tpu.memory_space<vmem>>, vector<9x8xf32>
    %c0_1 = arith.constant 0 : index
    %c0_2 = arith.constant 0 : index
    %1 = vector.load %arg2[%c0_1, %c0_2] : memref<8x128xf32, #tpu.memory_space<vmem>>, vector<8x128xf32>
    %cst = arith.constant dense<0.000000e+00> : vector<9x128xf32>
    %2 = tpu.matmul %0, %1, %cst {dimension_numbers = #tpu.dot_dimension_numbers<[1], [0], [0], [1], [0, 0, 1, 1], [], []>, precision = #tpu.contract_precision<fp32>} : vector<9x8xf32>, vector<8x128xf32>, vector<9x128xf32> -> vector<9x128xf32>
    %c0_3 = arith.constant 0 : index
    %c0_4 = arith.constant 0 : index
    %3 = vector.load %arg3[%c0_3, %c0_4] : memref<9x1xf32, #tpu.memory_space<vmem>>, vector<9x1xf32>
    %4 = vector.broadcast %3 : vector<9x1xf32> to vector<9x128xf32>
    %5 = arith.addf %2, %4 : vector<9x128xf32>
    %6 = arith.mulf %5, %5 : vector<9x128xf32>
    %cst_5 = arith.constant dense<0.000000e+00> : vector<128xf32>
    %7 = vector.multi_reduction <add>, %6, %cst_5 [0] : vector<9x128xf32> to vector<128xf32>
    %8 = vector.shape_cast %7 : vector<128xf32> to vector<1x128xf32>
    %cst_6 = arith.constant 1.000000e+00 : f32
    %9 = vector.broadcast %cst_6 : f32 to vector<1x128xf32>
    %10 = arith.addf %8, %9 : vector<1x128xf32>
    %11 = math.sqrt %10 : vector<1x128xf32>
    %12 = tpu.iota {dimensions = array<i32: 0>} : vector<9x128xi32>
    %c0_i32 = arith.constant 0 : i32
    %13 = vector.broadcast %c0_i32 : i32 to vector<9x128xi32>
    %14 = arith.cmpi eq, %12, %13 : vector<9x128xi32>
    %15 = vector.shape_cast %11 : vector<1x128xf32> to vector<1x128xf32>
    %16 = vector.broadcast %15 : vector<1x128xf32> to vector<9x128xf32>
    %17 = arith.select %14, %16, %5 : vector<9x128xi1>, vector<9x128xf32>
    %c0_7 = arith.constant 0 : index
    %c0_8 = arith.constant 0 : index
    %18 = vector.load %arg4[%c0_7, %c0_8] : memref<9x128xf32, #tpu.memory_space<vmem>>, vector<9x128xf32>
    tpu.vector_store %arg4[%c0_7, %c0_8], %17 {strides = array<i32>} : memref<9x128xf32, #tpu.memory_space<vmem>>, vector<9x128xf32>,
    return
  }
  func.func @transform_0(%arg0: i32) -> (i32, i32) {
    %c0_i32 = arith.constant 0 : i32
    %c0_i32_0 = arith.constant 0 : i32
    %c0_i32_1 = arith.constant 0 : i32
    return %c0_i32, %c0_i32_0 : i32, i32
  }
  func.func @transform_1(%arg0: i32) -> (i32, i32) {
    %c0_i32 = arith.constant 0 : i32
    %c0_i32_0 = arith.constant 0 : i32
    return %c0_i32, %arg0 : i32, i32
  }
  func.func @transform_2(%arg0: i32) -> (i32, i32) {
    %c0_i32 = arith.constant 0 : i32
    %c0_i32_0 = arith.constant 0 : i32
    %c0_i32_1 = arith.constant 0 : i32
    return %c0_i32, %c0_i32_0 : i32, i32
  }
  func.func @transform_3(%arg0: i32) -> (i32, i32) {
    %c0_i32 = arith.constant 0 : i32
    %c0_i32_0 = arith.constant 0 : i32
    return %c0_i32, %arg0 : i32, i32
  }
}

</mosaic_0001>

<llo_original>
// kernel: tpu_custom_call.1
$region0: #{tpu_custom_call.1}
  #allocation0 [shape = 'u32[]', space=smem, size = 0x4, offset = 0x4, fixed_abs, tag = 'smem constant byte address 0x4 - core index']
  #allocation1 [shape = 'u32[72,128]{1,0:T(1,128)}', space=vmem, size = 0x9000, scoped, tag = 'internal scratch']
  %s0 = inlined_call_operand.vmem [shape: f32[9,8], index: 0, kind: input, shape index: {}]
  %s1 = inlined_call_operand.vmem [shape: f32[8,128], index: 1, kind: input, shape index: {}]
  %s2 = inlined_call_operand.vmem [shape: f32[9,1], index: 2, kind: input, shape index: {}]
  %s3 = inlined_call_operand.hbm [shape: f32[9,128], index: 3, kind: output, shape index: {}]
  %s4 = sld [smem:[#allocation0]]
  $region22: #{tpu_custom_call.1} parent=0
    _
  %s6 = ssub.s32 1, %s4
  %s7 = scalar_select 0, %s6, %s4
  $region1: #{tpu_custom_call.1} parent=0
    #allocation2 [shape = 'u8[8192]{0}', space=vmem, size = 0x2000, scoped, tag = 'output window, operand 0, single buffered']
    #allocation3 [shape = 's32[1]{0}', space=sflag, size = 0x4, scoped, tag = 'scoped memory for tpu_custom_call.1']
    %8 = vsyncpa [#allocation3], 0
    // Predicated region
    $region2: #{tpu_custom_call.1} parent=1 // pred_check
      _
    $region3: #{tpu_custom_call.1} parent=1 // pred_check_branch
      %10 = sbr.rel (0) target = $region5
    $region4: #{tpu_custom_call.1} parent=1 // pred_region
      _
    $region5: #{tpu_custom_call.1} parent=1 // pred_fallthru
      _
    // Predicated region
    $region6: #{tpu_custom_call.1} parent=1 // pred_check
      _
    $region7: #{tpu_custom_call.1} parent=1 // pred_check_branch
      %12 = sbr.rel (0) target = $region9
    $region8: #{tpu_custom_call.1} parent=1 // pred_region
      _
    $region9: #{tpu_custom_call.1} parent=1 // pred_fallthru
      _
    // Predicated region
    $region10: #{tpu_custom_call.1} parent=1 // pred_check
      _
    $region11: #{tpu_custom_call.1} parent=1 // pred_check_branch
      %14 = sbr.rel (0) target = $region13
    $region12: #{tpu_custom_call.1} parent=1 // pred_region
      _
    $region13: #{tpu_custom_call.1} parent=1 // pred_fallthru
      _
    %v15 = vld [vmem:[%s0] sm:$0xff]
    %v16 = vld [vmem:[%s0 + $0x8] sm:$0x1]
    %v17 = vld [vmem:[%s1] sm:$0xff]
    %v18 = vld [vmem:[%s2] sm:$0xff]
    %v19 = vld [vmem:[%s2 + $0x8] sm:$0x1]
    %21 = vset.pattern.permute.xlu0 0
    %22 = vperm.xlu0 %21, %v18
    %v23 = vpop.permute.xlu0 %22
    %26 = vset.pattern.permute.xlu0 0
    %27 = vperm.xlu0 %26, %v19
    %v28 = vpop.permute.xlu0 %27
    %vm30 = vcmask 64512
    %v32 = vsel %vm30, %v15, 0
    %v35 = vsel %vm30, %v16, 0
    %37 = vmatpush.msra.mxu0 0.0
    %38 = vmatpush.msra.mxu0 0.0
    %39 = vmatpush.msra.mxu0 0.0
    %40 = vmatpush.msra.mxu0 0.0
    %41 = vmatpush.msra.mxu0 0.0
    %42 = vmatpush.msra.mxu0 0.0
    %43 = vmatpush.msra.mxu0 0.0
    %44 = vmatpush.msra.mxu0 0.0
    %45 = vmatpush.msra.mxu0 0.0
    %46 = vmatpush.msra.mxu0 0.0
    %47 = vmatpush.msra.mxu0 0.0
    %48 = vmatpush.msra.mxu0 0.0
    %49 = vmatpush.msra.mxu0 0.0
    %50 = vmatpush.msra.mxu0 0.0
    %51 = vmatpush.msra.mxu0 0.0
    %v52 = vand.u32 %v17, 4294901760
    %53 = vmatpush.msra.mxu0 %v52
    %v54 = vand.u32 %v32, 4294901760
    %v55 = vsub.f32 %v32, %v54
    %v56 = vand.u32 %v55, 4294901760
    %v57 = vsub.f32 %v55, %v56
    %v58 = vand.u32 %v57, 4294901760
    %59 = vmatmul.f32.gmra.mxu0 %v58
    %v60 = vpop.f32.mrf.mxu0
    %v61 = vadd.f32 %v23, %v60
    %v62 = vand.u32 %v35, 4294901760
    %v63 = vsub.f32 %v35, %v62
    %v64 = vand.u32 %v63, 4294901760
    %v65 = vsub.f32 %v63, %v64
    %v66 = vand.u32 %v65, 4294901760
    %67 = vmatmul.f32.gmra.mxu0 %v66
    %v68 = vpop.f32.mrf.mxu0
    %v69 = vadd.f32 %v28, %v68
    %70 = vdwg.mxu0
    %71 = vmatpush.msra.mxu0 0.0
    %72 = vmatpush.msra.mxu0 0.0
    %73 = vmatpush.msra.mxu0 0.0
    %74 = vmatpush.msra.mxu0 0.0
    %75 = vmatpush.msra.mxu0 0.0
    %76 = vmatpush.msra.mxu0 0.0
    %77 = vmatpush.msra.mxu0 0.0
    %78 = vmatpush.msra.mxu0 0.0
    %79 = vmatpush.msra.mxu0 0.0
    %80 = vmatpush.msra.mxu0 0.0
    %81 = vmatpush.msra.mxu0 0.0
    %82 = vmatpush.msra.mxu0 0.0
    %83 = vmatpush.msra.mxu0 0.0
    %84 = vmatpush.msra.mxu0 0.0
    %85 = vmatpush.msra.mxu0 0.0
    %v86 = vand.u32 %v17, 4294901760
    %v87 = vsub.f32 %v17, %v86
    %v88 = vand.u32 %v87, 4294901760
    %v89 = vsub.f32 %v87, %v88
    %v90 = vand.u32 %v89, 4294901760
    %91 = vmatpush.msra.mxu0 %v90
    %v92 = vand.u32 %v32, 4294901760
    %93 = vmatmul.f32.gmra.mxu0 %v92
    %v94 = vpop.f32.mrf.mxu0
    %v95 = vadd.f32 %v61, %v94
    %v96 = vand.u32 %v35, 4294901760
    %97 = vmatmul.f32.gmra.mxu0 %v96
    %v98 = vpop.f32.mrf.mxu0
    %v99 = vadd.f32 %v69, %v98
    %100 = vdwg.mxu0
    %101 = vmatpush.msra.mxu0 0.0
    %102 = vmatpush.msra.mxu0 0.0
    %103 = vmatpush.msra.mxu0 0.0
    %104 = vmatpush.msra.mxu0 0.0
    %105 = vmatpush.msra.mxu0 0.0
    %106 = vmatpush.msra.mxu0 0.0
    %107 = vmatpush.msra.mxu0 0.0
    %108 = vmatpush.msra.mxu0 0.0
    %109 = vmatpush.msra.mxu0 0.0
    %110 = vmatpush.msra.mxu0 0.0
    %111 = vmatpush.msra.mxu0 0.0
    %112 = vmatpush.msra.mxu0 0.0
    %113 = vmatpush.msra.mxu0 0.0
    %114 = vmatpush.msra.mxu0 0.0
    %115 = vmatpush.msra.mxu0 0.0
    %v116 = vand.u32 %v17, 4294901760
    %v117 = vsub.f32 %v17, %v116
    %118 = vmatpush.msra.mxu0 %v117
    %v119 = vand.u32 %v32, 4294901760
    %v120 = vsub.f32 %v32, %v119
    %121 = vmatmul.f32.gmra.mxu0 %v120
    %v122 = vpop.f32.mrf.mxu0
    %v123 = vadd.f32 %v95, %v122
    %v124 = vand.u32 %v35, 4294901760
    %v125 = vsub.f32 %v35, %v124
    %126 = vmatmul.f32.gmra.mxu0 %v125
    %v127 = vpop.f32.mrf.mxu0
    %v128 = vadd.f32 %v99, %v127
    %129 = vdwg.mxu0
    %130 = vmatpush.msra.mxu0 0.0
    %131 = vmatpush.msra.mxu0 0.0
    %132 = vmatpush.msra.mxu0 0.0
    %133 = vmatpush.msra.mxu0 0.0
    %134 = vmatpush.msra.mxu0 0.0
    %135 = vmatpush.msra.mxu0 0.0
    %136 = vmatpush.msra.mxu0 0.0
    %137 = vmatpush.msra.mxu0 0.0
    %138 = vmatpush.msra.mxu0 0.0
    %139 = vmatpush.msra.mxu0 0.0
    %140 = vmatpush.msra.mxu0 0.0
    %141 = vmatpush.msra.mxu0 0.0
    %142 = vmatpush.msra.mxu0 0.0
    %143 = vmatpush.msra.mxu0 0.0
    %144 = vmatpush.msra.mxu0 0.0
    %v145 = vand.u32 %v17, 4294901760
    %146 = vmatpush.msra.mxu0 %v145
    %v147 = vand.u32 %v32, 4294901760
    %v148 = vsub.f32 %v32, %v147
    %v149 = vand.u32 %v148, 4294901760
    %150 = vmatmul.f32.gmra.mxu0 %v149
    %v151 = vpop.f32.mrf.mxu0
    %v152 = vadd.f32 %v123, %v151
    %v153 = vand.u32 %v35, 4294901760
    %v154 = vsub.f32 %v35, %v153
    %v155 = vand.u32 %v154, 4294901760
    %156 = vmatmul.f32.gmra.mxu0 %v155
    %v157 = vpop.f32.mrf.mxu0
    %v158 = vadd.f32 %v128, %v157
    %159 = vdwg.mxu0
    %160 = vmatpush.msra.mxu0 0.0
    %161 = vmatpush.msra.mxu0 0.0
    %162 = vmatpush.msra.mxu0 0.0
    %163 = vmatpush.msra.mxu0 0.0
    %164 = vmatpush.msra.mxu0 0.0
    %165 = vmatpush.msra.mxu0 0.0
    %166 = vmatpush.msra.mxu0 0.0
    %167 = vmatpush.msra.mxu0 0.0
    %168 = vmatpush.msra.mxu0 0.0
    %169 = vmatpush.msra.mxu0 0.0
    %170 = vmatpush.msra.mxu0 0.0
    %171 = vmatpush.msra.mxu0 0.0
    %172 = vmatpush.msra.mxu0 0.0
    %173 = vmatpush.msra.mxu0 0.0
    %174 = vmatpush.msra.mxu0 0.0
    %v175 = vand.u32 %v17, 4294901760
    %v176 = vsub.f32 %v17, %v175
    %v177 = vand.u32 %v176, 4294901760
    %178 = vmatpush.msra.mxu0 %v177
    %v179 = vand.u32 %v32, 4294901760
    %180 = vmatmul.f32.gmra.mxu0 %v179
    %v181 = vpop.f32.mrf.mxu0
    %v182 = vadd.f32 %v152, %v181
    %v183 = vand.u32 %v35, 4294901760
    %184 = vmatmul.f32.gmra.mxu0 %v183
    %v185 = vpop.f32.mrf.mxu0
    %v186 = vadd.f32 %v158, %v185
    %187 = vdwg.mxu0
    %188 = vmatpush.msra.mxu0 0.0
    %189 = vmatpush.msra.mxu0 0.0
    %190 = vmatpush.msra.mxu0 0.0
    %191 = vmatpush.msra.mxu0 0.0
    %192 = vmatpush.msra.mxu0 0.0
    %193 = vmatpush.msra.mxu0 0.0
    %194 = vmatpush.msra.mxu0 0.0
    %195 = vmatpush.msra.mxu0 0.0
    %196 = vmatpush.msra.mxu0 0.0
    %197 = vmatpush.msra.mxu0 0.0
    %198 = vmatpush.msra.mxu0 0.0
    %199 = vmatpush.msra.mxu0 0.0
    %200 = vmatpush.msra.mxu0 0.0
    %201 = vmatpush.msra.mxu0 0.0
    %202 = vmatpush.msra.mxu0 0.0
    %v203 = vand.u32 %v17, 4294901760
    %204 = vmatpush.msra.mxu0 %v203
    %v205 = vand.u32 %v32, 4294901760
    %206 = vmatmul.f32.gmra.mxu0 %v205
    %v207 = vpop.f32.mrf.mxu0
    %v208 = vadd.f32 %v182, %v207
    %v209 = vand.u32 %v35, 4294901760
    %210 = vmatmul.f32.gmra.mxu0 %v209
    %v211 = vpop.f32.mrf.mxu0
    %v212 = vadd.f32 %v186, %v211
    %213 = vdwg.mxu0
    %v214 = vmul.f32 %v208, %v208
    %v215 = vmul.f32 %v212, %v212
    %vm216 = vcmask 1040384
    %v217 = vsel %vm216, %v215, 0.0
    %v218 = vadd.f32 %v214, %v217
    %v219 = vrot.slane %v218, 4
    %v220 = vadd.f32 %v218, %v219
    %v221 = vrot.slane %v220, 2
    %v222 = vadd.f32 %v220, %v221
    %v223 = vrot.slane %v222, 1
    %v224 = vadd.f32 %v222, %v223
    %v225 = vadd.f32 %v224, 1.0
    %v226 = vrsqrt.pop %v225
    %v227 = vmul.f32 %v226, %v225
    %v228 = vmul.f32 %v227, %v226
    %v229 = vmul.f32 0.5, %v228
    %v230 = vsub.f32 1.5, %v229
    %v231 = vmul.f32 %v226, %v230
    %v232 = vmul.f32 %v225, %v231
    %vm233 = vcmp.eq.f32.partialorder %v225, inf
    %v234 = vsel %vm233, %v225, %v232
    %vm235 = vcmp.eq.f32.partialorder %v225, 0.0
    %v236 = vand.u32 %v225, 2147483648
    %v237 = vsel %vm235, %v236, %v234
    %v238 = vlaneseq
    %v239 = vshrl.u32 %v238, 7
    %v240 = vadd.s32 %v239, 8
    %vm241 = vcmp.eq.s32.totalorder %v239, 0
    %vm242 = vcmp.eq.s32.totalorder %v240, 0
    %v243 = vsel %vm241, %v237, %v208
    %v244 = vsel %vm242, %v237, %v212
    %245 = vst [vmem:[#allocation2] sm:$0xff] %v243
    %246 = vst [vmem:[#allocation2 + $0x8] sm:$0x1] %v244
    // Predicated region
    $region14: #{tpu_custom_call.1} parent=1 // pred_check
      _
    $region15: #{tpu_custom_call.1} parent=1 // pred_check_branch
      %248 = sbr.rel (0) target = $region17
    $region16: #{tpu_custom_call.1} parent=1 // pred_region
      %250 = vsyncadd [#allocation3], 0
      %s251 = sshll.u32 [#allocation2], 4
      %s252 = int_to_ptr.vmem [resolvable:$true] %s251
      %s253 = sshll.u32 %s3, 4
      %s254 = int_to_ptr.hbm [resolvable:$true] %s253
      %259 = dma.vmem_to_hbm [thread:$0]  %s252, 256, %s254, [#allocation3], 128, 128, 8
    $region17: #{tpu_custom_call.1} parent=1 // pred_fallthru
      _
    // Predicated region
    $region18: #{tpu_custom_call.1} parent=1 // pred_check
      _
    $region19: #{tpu_custom_call.1} parent=1 // pred_check_branch
      %261 = sbr.rel (0) target = $region21
    $region20: #{tpu_custom_call.1} parent=1 // pred_region
      %263 = dma.done [#allocation3], 256
    $region21: #{tpu_custom_call.1} parent=1 // pred_fallthru
      _
    %264 = vsyncpa [#allocation3], 1

</llo_original>
